<compile_context>
chip_gen: v6e
topology: v6e:2x2x1
jax: 0.10.0
libtpu: 0.0.40
codegen_flags: <defaults>
</compile_context>

<pallas_src>
import jax
import jax.numpy as jnp
from jax.experimental import pallas as pl
from jax.experimental.pallas import tpu as pltpu


def _plate_ce_kernel(out_ref, tgt_ref, tgrp_ref, grp_ref, psum_ref):
    """One batch tile: group-masked cross entropy, reduced to a block partial sum.

    out_ref : [TB, C]  logits (input dtype, cast to f32 after load)
    tgt_ref : [TB, 1]  i32 target class per row
    tgrp_ref: [TB, 1]  i32 target's group id per row (precomputed in wrapper)
    grp_ref : [1,  C]  i32 class -> group id lookup table
    psum_ref: [1, 128] f32 block partial sum of per-sample losses (lane-broadcast)
    """
    x = out_ref[...].astype(jnp.float32)        # [TB, C]
    tgt = tgt_ref[...]                          # [TB, 1] i32
    tgrp = tgrp_ref[...]                        # [TB, 1] i32
    grp = grp_ref[...]                          # [1,  C] i32

    # Logit of the target class (one-hot select + lane reduce).
    col = jax.lax.broadcasted_iota(jnp.int32, x.shape, 1)                      # [TB, C]
    tgt_logit = jnp.sum(jnp.where(col == tgt, x, 0.0), axis=1, keepdims=True)  # [TB, 1]

    # log-sum-exp restricted to the target's class group.
    # Mask folded into the max; exp(-inf) == 0 zeroes out-of-group lanes exactly.
    in_group = grp == tgrp                                                     # [TB, C]
    x_g = jnp.where(in_group, x, -jnp.inf)
    m = jnp.max(x_g, axis=1, keepdims=True)     # finite: the target is always in its group
    e = jnp.exp(x_g - m)
    lse = jnp.log(jnp.sum(e, axis=1, keepdims=True)) + m                       # [TB, 1]

    per_sample = lse - tgt_logit                                               # [TB, 1]
    block_sum = jnp.sum(per_sample, axis=0, keepdims=True)                     # [1, 1]
    # Lane-dense, unmasked full-width store of the block partial sum.
    psum_ref[...] = jnp.broadcast_to(block_sum, psum_ref.shape)


def _pick_batch_tile(B, C, itemsize, vmem_budget_bytes, sublane):
    """Largest batch tile whose working set fits the VMEM budget.

    Working set per row ~= double-buffered logits (2 * C * itemsize) plus ~4
    full-width f32 temporaries inside the kernel (4 * C * 4 bytes).
    """
    per_row = C * (2 * itemsize + 4 * 4) + 64
    cap = min(vmem_budget_bytes // per_row, 512)   # diminishing returns past ~512 rows
    if B <= max(cap, sublane):
        return B                                   # one block over the whole batch
    t = (cap // sublane) * sublane
    while t >= sublane:
        if B % t == 0:
            return t
        t -= sublane
    return B  # no suitable divisor: fall back to a single full-batch block


def plate_cross_entropy_loss(output, target, class_group, *, tb=None,
                             vmem_budget_bytes=32 * 1024 * 1024):
    """output: [B, C] f32/bf16 logits, target: [B] int, class_group: [C] int -> scalar f32."""
    B, C = output.shape
    target = jnp.asarray(target).reshape(B).astype(jnp.int32)
    class_group = jnp.asarray(class_group).reshape(C).astype(jnp.int32)

    # Precompute each sample's group id (tiny gather) so the kernel avoids a
    # second one-hot lane reduction per tile.
    tgt_group = class_group[target]                                            # [B]

    itemsize = jnp.dtype(output.dtype).itemsize
    sublane = 16 if output.dtype == jnp.bfloat16 else 8
    if tb is None:
        tb = _pick_batch_tile(B, C, itemsize, vmem_budget_bytes, sublane)
    assert B % tb == 0, "batch must be divisible by the batch tile"
    num_blocks = B // tb

    partials = pl.pallas_call(
        _plate_ce_kernel,
        out_shape=jax.ShapeDtypeStruct((num_blocks, 128), jnp.float32),
        grid_spec=pltpu.PrefetchScalarGridSpec(
            num_scalar_prefetch=0,
            grid=(num_blocks,),
            in_specs=[
                pl.BlockSpec((tb, C), lambda i: (i, 0)),   # logits tile (bf16/f32, cast in-kernel)
                pl.BlockSpec((tb, 1), lambda i: (i, 0)),   # target class per row
                pl.BlockSpec((tb, 1), lambda i: (i, 0)),   # target group per row
                pl.BlockSpec((1, C), lambda i: (0, 0)),    # class -> group table (shared)
            ],
            out_specs=pl.BlockSpec((1, 128), lambda i: (i, 0)),
        ),
        compiler_params=pltpu.CompilerParams(
            dimension_semantics=("parallel",),             # per-block partials keep megacore sharding
            vmem_limit_bytes=48 * 1024 * 1024,
        ),
    )(output, target.reshape(B, 1), tgt_group.reshape(B, 1), class_group.reshape(1, C))

    # Each (1, 128) row holds the same block sum; combine block partials -> mean.
    return jnp.sum(partials[:, 0]) / jnp.float32(B)


def _reference_loss(output, target, class_group):
    """Pure-JAX reference mirroring the PyTorch forward."""
    out_f32 = output.astype(jnp.float32)
    tgt_grp = class_group[target]                                  # [B]
    mask = class_group[None, :] == tgt_grp[:, None]                # [B, C]
    xm = jnp.where(mask, out_f32, -jnp.inf)
    lse = jax.scipy.special.logsumexp(xm, axis=1)                  # [B]
    tgt_logit = jnp.take_along_axis(out_f32, target[:, None], axis=1)[:, 0]
    return jnp.mean(lse - tgt_logit)


if __name__ == "__main__":
    B, C = 8, 64  # small shapes; C divisible by the 4 groups

    # synthetic deterministic g2rna: group j = sorted({c : c % 4 == j})
    class_group = (jnp.arange(C, dtype=jnp.int32) % 4)

    key = jax.random.PRNGKey(0)
    k_out, k_tgt = jax.random.split(key)
    output = jax.random.normal(k_out, (B, C), dtype=jnp.float32)
    target = jax.random.randint(k_tgt, (B,), 0, C, dtype=jnp.int32)

    loss = plate_cross_entropy_loss(output, target, class_group)
    loss = jax.block_until_ready(loss)

    ref = jax.block_until_ready(_reference_loss(output, target, class_group))
    assert jnp.allclose(loss, ref, rtol=1e-5, atol=1e-5), (loss, ref)

    print("KERNEL_OK")
</pallas_src>

<mosaic_0001>
module attributes {stable_mosaic.version = 11 : i64} {
  func.func @_plate_ce_kernel(%arg0: i32, %arg1: memref<8x64xf32, #tpu.memory_space<vmem>>, %arg2: memref<8x1xi32, #tpu.memory_space<vmem>>, %arg3: memref<8x1xi32, #tpu.memory_space<vmem>>, %arg4: memref<1x64xi32, #tpu.memory_space<vmem>>, %arg5: memref<1x128xf32, #tpu.memory_space<vmem>>) attributes {dimension_semantics = [#tpu.dimension_semantics<parallel>], iteration_bounds = array<i64: 1>, scalar_prefetch = 0 : i64, scratch_operands = 0 : i64, tpu.core_type = #tpu.core_type<tc>, window_params = [{transform_indices = @transform_0, window_bounds = array<i64: 8, 64>}, {transform_indices = @transform_1, window_bounds = array<i64: 8, 1>}, {transform_indices = @transform_2, window_bounds = array<i64: 8, 1>}, {pipeline_mode = #tpu.pipeline_mode<synchronous>, transform_indices = @transform_3, window_bounds = array<i64: 1, 64>}, {transform_indices = @transform_4, window_bounds = array<i64: 1, 128>}]} {
    %c0 = arith.constant 0 : index
    %c0_0 = arith.constant 0 : index
    %0 = vector.load %arg1[%c0, %c0_0] : memref<8x64xf32, #tpu.memory_space<vmem>>, vector<8x64xf32>
    %c0_1 = arith.constant 0 : index
    %c0_2 = arith.constant 0 : index
    %1 = vector.load %arg2[%c0_1, %c0_2] : memref<8x1xi32, #tpu.memory_space<vmem>>, vector<8x1xi32>
    %c0_3 = arith.constant 0 : index
    %c0_4 = arith.constant 0 : index
    %2 = vector.load %arg3[%c0_3, %c0_4] : memref<8x1xi32, #tpu.memory_space<vmem>>, vector<8x1xi32>
    %c0_5 = arith.constant 0 : index
    %c0_6 = arith.constant 0 : index
    %3 = vector.load %arg4[%c0_5, %c0_6] : memref<1x64xi32, #tpu.memory_space<vmem>>, vector<1x64xi32>
    %4 = tpu.iota {dimensions = array<i32: 1>} : vector<8x64xi32>
    %5 = vector.broadcast %1 : vector<8x1xi32> to vector<8x64xi32>
    %6 = arith.cmpi eq, %4, %5 : vector<8x64xi32>
    %cst = arith.constant 0.000000e+00 : f32
    %7 = vector.broadcast %cst : f32 to vector<8x64xf32>
    %8 = arith.select %6, %0, %7 : vector<8x64xi1>, vector<8x64xf32>
    %cst_7 = arith.constant dense<0.000000e+00> : vector<8xf32>
    %9 = vector.multi_reduction <add>, %8, %cst_7 [1] : vector<8x64xf32> to vector<8xf32>
    %10 = vector.shape_cast %9 : vector<8xf32> to vector<8x1xf32>
    %11 = vector.broadcast %3 : vector<1x64xi32> to vector<8x64xi32>
    %12 = vector.broadcast %2 : vector<8x1xi32> to vector<8x64xi32>
    %13 = arith.cmpi eq, %11, %12 : vector<8x64xi32>
    %cst_8 = arith.constant 0xFF800000 : f32
    %14 = vector.broadcast %cst_8 : f32 to vector<8x64xf32>
    %15 = arith.select %13, %0, %14 : vector<8x64xi1>, vector<8x64xf32>
    %cst_9 = arith.constant dense<0xFF800000> : vector<8xf32>
    %16 = vector.multi_reduction <maximumf>, %15, %cst_9 [1] : vector<8x64xf32> to vector<8xf32>
    %17 = vector.shape_cast %16 : vector<8xf32> to vector<8x1xf32>
    %18 = vector.broadcast %17 : vector<8x1xf32> to vector<8x64xf32>
    %19 = arith.subf %15, %18 : vector<8x64xf32>
    %20 = math.exp %19 : vector<8x64xf32>
    %cst_10 = arith.constant dense<0.000000e+00> : vector<8xf32>
    %21 = vector.multi_reduction <add>, %20, %cst_10 [1] : vector<8x64xf32> to vector<8xf32>
    %22 = vector.shape_cast %21 : vector<8xf32> to vector<8x1xf32>
    %23 = math.log %22 : vector<8x1xf32>
    %24 = arith.addf %23, %17 : vector<8x1xf32>
    %25 = arith.subf %24, %10 : vector<8x1xf32>
    %cst_11 = arith.constant dense<0.000000e+00> : vector<1xf32>
    %26 = vector.multi_reduction <add>, %25, %cst_11 [0] : vector<8x1xf32> to vector<1xf32>
    %27 = vector.shape_cast %26 : vector<1xf32> to vector<1x1xf32>
    %28 = vector.shape_cast %27 : vector<1x1xf32> to vector<1x1xf32>
    %29 = vector.broadcast %28 : vector<1x1xf32> to vector<1x128xf32>
    %c0_12 = arith.constant 0 : index
    %c0_13 = arith.constant 0 : index
    %30 = vector.load %arg5[%c0_12, %c0_13] : memref<1x128xf32, #tpu.memory_space<vmem>>, vector<1x128xf32>
    tpu.vector_store %arg5[%c0_12, %c0_13], %29 {strides = array<i32>} : memref<1x128xf32, #tpu.memory_space<vmem>>, vector<1x128xf32>,
    return
  }
  func.func @transform_0(%arg0: i32) -> (i32, i32) {
    %c0_i32 = arith.constant 0 : i32
    %c0_i32_0 = arith.constant 0 : i32
    return %arg0, %c0_i32 : i32, i32
  }
  func.func @transform_1(%arg0: i32) -> (i32, i32) {
    %c0_i32 = arith.constant 0 : i32
    %c0_i32_0 = arith.constant 0 : i32
    return %arg0, %c0_i32 : i32, i32
  }
  func.func @transform_2(%arg0: i32) -> (i32, i32) {
    %c0_i32 = arith.constant 0 : i32
    %c0_i32_0 = arith.constant 0 : i32
    return %arg0, %c0_i32 : i32, i32
  }
  func.func @transform_3(%arg0: i32) -> (i32, i32) {
    %c0_i32 = arith.constant 0 : i32
    %c0_i32_0 = arith.constant 0 : i32
    %c0_i32_1 = arith.constant 0 : i32
    return %c0_i32, %c0_i32_0 : i32, i32
  }
  func.func @transform_4(%arg0: i32) -> (i32, i32) {
    %c0_i32 = arith.constant 0 : i32
    %c0_i32_0 = arith.constant 0 : i32
    return %arg0, %c0_i32 : i32, i32
  }
}

</mosaic_0001>

<llo_original>
// kernel: tpu_custom_call.1
$region0: #{tpu_custom_call.1}
  #allocation0 [shape = 'u32[]', space=smem, size = 0x4, offset = 0x4, fixed_abs, tag = 'smem constant byte address 0x4 - core index']
  #allocation1 [shape = 'u32[144,128]{1,0:T(1,128)}', space=vmem, size = 0x12000, scoped, tag = 'internal scratch']
  %s0 = inlined_call_operand.vmem [shape: f32[8,64], index: 0, kind: input, shape index: {}]
  %s1 = inlined_call_operand.vmem [shape: s32[8,1], index: 1, kind: input, shape index: {}]
  %s2 = inlined_call_operand.vmem [shape: s32[8,1], index: 2, kind: input, shape index: {}]
  %s3 = inlined_call_operand.vmem [shape: s32[1,64], index: 3, kind: input, shape index: {}]
  %s4 = inlined_call_operand.hbm [shape: f32[1,128], index: 4, kind: output, shape index: {}]
  %s5 = sld [smem:[#allocation0]]
  $region26: #{tpu_custom_call.1} parent=0
    _
  %s7 = ssub.s32 1, %s5
  %s8 = scalar_select 0, %s7, %s5
  $region1: #{tpu_custom_call.1} parent=0
    #allocation2 [shape = 'u8[512]{0}', space=vmem, size = 0x400, scoped, tag = 'output window, operand 0, single buffered']
    #allocation3 [shape = 's32[1]{0}', space=sflag, size = 0x4, scoped, tag = 'scoped memory for tpu_custom_call.1']
    %9 = vsyncpa [#allocation3], 0
    // Predicated region
    $region2: #{tpu_custom_call.1} parent=1 // pred_check
      _
    $region3: #{tpu_custom_call.1} parent=1 // pred_check_branch
      %11 = sbr.rel (0) target = $region5
    $region4: #{tpu_custom_call.1} parent=1 // pred_region
      _
    $region5: #{tpu_custom_call.1} parent=1 // pred_fallthru
      _
    // Predicated region
    $region6: #{tpu_custom_call.1} parent=1 // pred_check
      _
    $region7: #{tpu_custom_call.1} parent=1 // pred_check_branch
      %13 = sbr.rel (0) target = $region9
    $region8: #{tpu_custom_call.1} parent=1 // pred_region
      _
    $region9: #{tpu_custom_call.1} parent=1 // pred_fallthru
      _
    // Predicated region
    $region10: #{tpu_custom_call.1} parent=1 // pred_check
      _
    $region11: #{tpu_custom_call.1} parent=1 // pred_check_branch
      %15 = sbr.rel (0) target = $region13
    $region12: #{tpu_custom_call.1} parent=1 // pred_region
      _
    $region13: #{tpu_custom_call.1} parent=1 // pred_fallthru
      _
    // Predicated region
    $region14: #{tpu_custom_call.1} parent=1 // pred_check
      _
    $region15: #{tpu_custom_call.1} parent=1 // pred_check_branch
      %17 = sbr.rel (0) target = $region17
    $region16: #{tpu_custom_call.1} parent=1 // pred_region
      _
    $region17: #{tpu_custom_call.1} parent=1 // pred_fallthru
      _
    %v18 = vld [vmem:[%s0] sm:$0xff]
    %v19 = vld [vmem:[%s1] sm:$0xff]
    %v20 = vld [vmem:[%s2] sm:$0xff]
    %v21 = vld [vmem:[%s3] sm:$0x1]
    %v22 = vlaneseq
    %v23 = vand.u32 %v22, 127
    %24 = vset.pattern.permute.xlu0 0
    %25 = vperm.xlu0 %24, %v19
    %v26 = vpop.permute.xlu0 %25
    %vm27 = vcmp.eq.s32.totalorder %v23, %v26
    %v28 = vsel %vm27, %v18, 0.0
    %vm29 = vcmask 523264
    %v30 = vsel %vm29, %v28, 0.0
    %31 = vadd.xlane.f32.xlu0 %v30
    %v32 = vpop.xlane.xlu0 %31
    %v33 = vlaneseq
    %v34 = vshrl.u32 %v33, 7
    %v35 = vsub.s32 0, %v34
    %v36 = vrot.slane %v21, %v35
    %37 = vset.pattern.permute.xlu0 0
    %38 = vperm.xlu0 %37, %v20
    %v39 = vpop.permute.xlu0 %38
    %vm40 = vcmp.eq.s32.totalorder %v36, %v39
    %v41 = vsel %vm40, %v18, -inf
    %v42 = vsel %vm29, %v41, -inf
    %43 = vmax.xlane.f32.xlu0 %v42
    %v44 = vpop.xlane.xlu0 %43
    %v45 = vsub.f32 %v41, %v44
    %v46 = vmul.f32 %v45, 1.442695
    %v47 = vpow.pop %v46
    %v48 = vsel %vm29, %v47, 0.0
    %49 = vadd.xlane.f32.xlu0 %v48
    %v50 = vpop.xlane.xlu0 %49
    %v51 = vlog2.pop %v50
    %v52 = vmul.f32 %v51, 0.6931472
    %v53 = vadd.f32 %v52, %v44
    %v54 = vsub.f32 %v53, %v32
    %v55 = vrot.slane %v54, 4
    %v56 = vadd.f32 %v54, %v55
    %v57 = vrot.slane %v56, 2
    %v58 = vadd.f32 %v56, %v57
    %v59 = vrot.slane %v58, 1
    %v60 = vadd.f32 %v58, %v59
    %61 = vst [vmem:[#allocation2] sm:$0x1] %v60
    // Predicated region
    $region18: #{tpu_custom_call.1} parent=1 // pred_check
      _
    $region19: #{tpu_custom_call.1} parent=1 // pred_check_branch
      %63 = sbr.rel (0) target = $region21
    $region20: #{tpu_custom_call.1} parent=1 // pred_region
      %s65 = ssub.s32 16, 16
      %66 = vsyncadd [#allocation3], %s65
      %s68 = sshll.u32 [#allocation2], 4
      %s69 = int_to_ptr.vmem [resolvable:$true] %s68
      %71 = dma.vmem_to_hbm [thread:$0]  %s69, 16, %s4, [#allocation3]
    $region21: #{tpu_custom_call.1} parent=1 // pred_fallthru
      _
    // Predicated region
    $region22: #{tpu_custom_call.1} parent=1 // pred_check
      _
    $region23: #{tpu_custom_call.1} parent=1 // pred_check_branch
      %73 = sbr.rel (0) target = $region25
    $region24: #{tpu_custom_call.1} parent=1 // pred_region
      %74 = dma.done [#allocation3], 16
    $region25: #{tpu_custom_call.1} parent=1 // pred_fallthru
      _
    %75 = vsyncpa [#allocation3], 1

</llo_original>
